<compile_context>
chip_gen: v5e
topology: v5e:2x2
jax: 0.10.0
libtpu: 0.0.40
codegen_flags: <defaults>
</compile_context>

<pallas_src>
from functools import partial

import jax
import jax.numpy as jnp
from jax import lax
from jax.experimental import pallas as pl
from jax.experimental.pallas import tpu as pltpu

EPS = 0.0                      # GINConv default eps (train_eps=False)
F_IN, F_HID, F_OUT = 64, 32, 16
TM = 128                       # node-tile rows (MXU M dimension)
LANES = 128                    # TPU lane width; output padded to this for unmasked stores

# Row offsets inside the packed (SLAB_ROWS, LANES) bf16 parameter slab.  Every piece
# starts on a 16-row boundary so bf16 sublane-packed slices stay tile-aligned.
ROW_W1A, ROW_B1A = 0, 64       # Linear(64,32) weight / bias
ROW_W1B, ROW_B1B = 80, 112     # Linear(32,32)
ROW_W2A, ROW_B2A = 128, 160    # Linear(32,16)
ROW_W2B, ROW_B2B = 176, 192    # Linear(16,16) (lane-padded to 128)
SLAB_ROWS = 208


def graph_encoder_kernel(adj_ref, x_ref, slab_ref, out_ref, *, tiles_per_step):
    # adj_ref : (T, 128, 128) bf16  block-diag adjacency, (1+eps)I folded on the diagonal
    # x_ref   : (T, 128, 64)  bf16  node features
    # slab_ref: (208, 128)    bf16  packed weights / biases (resident across the grid)
    # out_ref : (T, 128, 128) bf16  lane-padded output (lanes >= 16 are zero)
    w1a = slab_ref[ROW_W1A:ROW_W1A + F_IN, 0:F_HID]
    b1a = slab_ref[ROW_B1A:ROW_B1A + 1, 0:F_HID]
    w1b = slab_ref[ROW_W1B:ROW_W1B + F_HID, 0:F_HID]
    b1b = slab_ref[ROW_B1B:ROW_B1B + 1, 0:F_HID]
    w2a = slab_ref[ROW_W2A:ROW_W2A + F_HID, 0:F_OUT]
    b2a = slab_ref[ROW_B2A:ROW_B2A + 1, 0:F_OUT]
    w2b = slab_ref[ROW_W2B:ROW_W2B + F_OUT, :]     # (16, 128), zero-padded lanes
    b2b = slab_ref[ROW_B2B:ROW_B2B + 1, :]         # (1, 128),  zero-padded lanes

    def body(t, carry):
        adj = adj_ref[t]                            # (128, 128) bf16

        # ---- GINConv 1: (A + (1+eps)I) @ x (self-term folded into adj), then MLP1 ----
        h = jnp.dot(adj, x_ref[t], preferred_element_type=jnp.float32)
        h = jnp.maximum(jnp.dot(h.astype(jnp.bfloat16), w1a,
                                preferred_element_type=jnp.float32) + b1a, 0.0)
        h = jnp.dot(h.astype(jnp.bfloat16), w1b,
                    preferred_element_type=jnp.float32) + b1b

        # ---- inter-layer ReLU ----
        h = jnp.maximum(h, 0.0)

        # ---- GINConv 2 ----
        g = jnp.dot(adj, h.astype(jnp.bfloat16), preferred_element_type=jnp.float32)
        g = jnp.maximum(jnp.dot(g.astype(jnp.bfloat16), w2a,
                                preferred_element_type=jnp.float32) + b2a, 0.0)
        o = jnp.dot(g.astype(jnp.bfloat16), w2b,
                    preferred_element_type=jnp.float32) + b2b

        out_ref[t] = o.astype(jnp.bfloat16)         # unmasked, lane-dense 128-lane store
        return carry

    lax.fori_loop(0, tiles_per_step, body, 0, unroll=True)


def pack_params(params):
    """Pack all weights/biases into one (208, 128) slab, stored bf16 (half-size DMA)."""
    slab = jnp.zeros((SLAB_ROWS, LANES), jnp.float32)
    slab = slab.at[ROW_W1A:ROW_W1A + F_IN, 0:F_HID].set(params["w1a"])
    slab = slab.at[ROW_B1A, 0:F_HID].set(params["b1a"])
    slab = slab.at[ROW_W1B:ROW_W1B + F_HID, 0:F_HID].set(params["w1b"])
    slab = slab.at[ROW_B1B, 0:F_HID].set(params["b1b"])
    slab = slab.at[ROW_W2A:ROW_W2A + F_HID, 0:F_OUT].set(params["w2a"])
    slab = slab.at[ROW_B2A, 0:F_OUT].set(params["b2a"])
    slab = slab.at[ROW_W2B:ROW_W2B + F_OUT, 0:F_OUT].set(params["w2b"])
    slab = slab.at[ROW_B2B, 0:F_OUT].set(params["b2b"])
    return slab.astype(jnp.bfloat16)


def graph_encoder(x, edge_index, params, *, max_tiles_per_step=16, min_grid_steps=8):
    """x: (B, N, 64) f32; edge_index: (B, 2, E) int32 (PyG convention: row0=src, row1=dst)."""
    B, N, F = x.shape
    assert F == F_IN
    # TODO(synk): N > 128 needs a CSR + PrefetchScalarGridSpec path (cross-tile adjacency
    # blocks); the dense block-diagonal packing here assumes a graph fits one 128-row tile.
    assert N <= TM, "graphs with more than 128 nodes are not supported by this kernel"

    gpt = TM // N                        # graphs packed per 128-row node tile
    rows_used = gpt * N                  # real rows per tile (rest are zero padding)
    num_tiles = -(-B // gpt)

    # Super-tile: T 128-row tiles per grid step; keep >= min_grid_steps steps when there is
    # enough work (so each v7x TensorCore still gets several steps to pipeline).
    T = max(1, min(max_tiles_per_step, num_tiles // min_grid_steps))
    num_tiles_p = -(-num_tiles // T) * T
    num_steps = num_tiles_p // T
    Bp = num_tiles_p * gpt

    # --- block-diagonal adjacency: edges + (1+eps)*I in ONE scatter, one bf16 cast ---
    # (the identity is ADDED, so explicit self-loop edges are still counted exactly)
    src = edge_index[:, 0, :].astype(jnp.int32)          # (B, E) message sources
    dst = edge_index[:, 1, :].astype(jnp.int32)          # (B, E) message targets
    gids = jnp.arange(B, dtype=jnp.int32)[:, None]
    tile_e = jnp.broadcast_to(gids // gpt, src.shape)
    base_e = (gids % gpt) * N
    node = jnp.arange(N, dtype=jnp.int32)[None, :]       # (1, N) diagonal entries
    tile_d = jnp.broadcast_to(gids // gpt, (B, N))
    diag = (gids % gpt) * N + node

    tiles = jnp.concatenate([tile_e.ravel(), tile_d.ravel()])
    rows = jnp.concatenate([(base_e + dst).ravel(), diag.ravel()])
    cols = jnp.concatenate([(base_e + src).ravel(), diag.ravel()])
    vals = jnp.concatenate([jnp.ones(src.size, jnp.float32),
                            jnp.full(diag.size, 1.0 + EPS, jnp.float32)])
    adj = (jnp.zeros((num_tiles_p, TM, TM), jnp.float32)
           .at[tiles, rows, cols].add(vals)
           .astype(jnp.bfloat16))        # small integer edge counts -> exact in bf16

    # --- node features: bf16 in the wrapper, gpt graphs per tile, rows padded to 128 ---
    x_p = jnp.pad(x, ((0, Bp - B), (0, 0), (0, 0))).astype(jnp.bfloat16)
    x_p = x_p.reshape(num_tiles_p, rows_used, F_IN)
    if rows_used < TM:
        x_p = jnp.pad(x_p, ((0, 0), (0, TM - rows_used), (0, 0)))

    slab = pack_params(params)

    kernel = partial(graph_encoder_kernel, tiles_per_step=T)
    out = pl.pallas_call(
        kernel,
        out_shape=jax.ShapeDtypeStruct((num_tiles_p, TM, LANES), jnp.bfloat16),
        grid=(num_steps,),
        in_specs=[
            # NOTE: if profiling on v7x shows the adjacency DMA still exposed, add
            # pipeline_mode=pl.Buffered(3) to this spec.
            pl.BlockSpec((T, TM, TM), lambda s: (s, 0, 0)),       # adjacency super-tile
            pl.BlockSpec((T, TM, F_IN), lambda s: (s, 0, 0)),     # node features (bf16)
            pl.BlockSpec((SLAB_ROWS, LANES), lambda s: (0, 0)),   # resident param slab
        ],
        out_specs=pl.BlockSpec((T, TM, LANES), lambda s: (s, 0, 0)),
        compiler_params=pltpu.CompilerParams(
            dimension_semantics=("parallel",)),
    )(adj, x_p, slab)

    out = out[:, :rows_used, :F_OUT].astype(jnp.float32)
    return out.reshape(Bp, N, F_OUT)[:B]


def init_linear(key, fan_in, fan_out):
    # PyTorch nn.Linear default init: U(-1/sqrt(fan_in), 1/sqrt(fan_in))
    kw, kb = jax.random.split(key)
    bound = 1.0 / jnp.sqrt(jnp.float32(fan_in))
    w = jax.random.uniform(kw, (fan_in, fan_out), jnp.float32, -bound, bound)
    b = jax.random.uniform(kb, (fan_out,), jnp.float32, -bound, bound)
    return w, b


def reference_forward_f32(x, edge_index, params):
    """Pure-f32 reference matching the original PyTorch module semantics."""
    _, N, _ = x.shape

    def one_graph(xg, eg):
        src, dst = eg[0], eg[1]
        adj = jnp.zeros((N, N), jnp.float32).at[dst, src].add(1.0)

        def gin(h, wa, ba, wb, bb):
            z = (1.0 + EPS) * h + adj @ h
            z = jnp.maximum(z @ wa + ba, 0.0)
            return z @ wb + bb

        h = gin(xg, params["w1a"], params["b1a"], params["w1b"], params["b1b"])
        h = jnp.maximum(h, 0.0)
        return gin(h, params["w2a"], params["b2a"], params["w2b"], params["b2b"])

    return jax.vmap(one_graph)(x, edge_index)


def reference_forward_matched(x, edge_index, params):
    """Mirror the kernel's precision: folded bf16 adjacency, bf16 matmul operands
    (x, activations, weights, biases), f32 accumulation, bf16 output store."""
    _, N, _ = x.shape
    p = {k: v.astype(jnp.bfloat16) for k, v in params.items()}

    def one_graph(xg, eg):
        src, dst = eg[0], eg[1]
        adj = (jnp.zeros((N, N), jnp.float32).at[dst, src].add(1.0)
               + (1.0 + EPS) * jnp.eye(N, dtype=jnp.float32)).astype(jnp.bfloat16)

        def mlp(z, wa, ba, wb, bb):
            z = jnp.maximum(jnp.dot(z.astype(jnp.bfloat16), wa,
                                    preferred_element_type=jnp.float32) + ba, 0.0)
            return jnp.dot(z.astype(jnp.bfloat16), wb,
                           preferred_element_type=jnp.float32) + bb

        h = jnp.dot(adj, xg.astype(jnp.bfloat16), preferred_element_type=jnp.float32)
        h = mlp(h, p["w1a"], p["b1a"], p["w1b"], p["b1b"])
        h = jnp.maximum(h, 0.0)
        g = jnp.dot(adj, h.astype(jnp.bfloat16), preferred_element_type=jnp.float32)
        o = mlp(g, p["w2a"], p["b2a"], p["w2b"], p["b2b"])
        return o.astype(jnp.bfloat16).astype(jnp.float32)

    return jax.vmap(one_graph)(x, edge_index)


if __name__ == "__main__":
    key = jax.random.PRNGKey(0)
    k_x, k_e, k1, k2, k3, k4, k_x2, k_e2 = jax.random.split(key, 8)

    w1a, b1a = init_linear(k1, F_IN, F_HID)
    w1b, b1b = init_linear(k2, F_HID, F_HID)
    w2a, b2a = init_linear(k3, F_HID, F_OUT)
    w2b, b2b = init_linear(k4, F_OUT, F_OUT)
    params = dict(w1a=w1a, b1a=b1a, w1b=w1b, b1b=b1b,
                  w2a=w2a, b2a=b2a, w2b=w2b, b2b=b2b)

    def run_and_check(x, edge_index):
        out = jax.block_until_ready(graph_encoder(x, edge_index, params))
        assert out.shape == (x.shape[0], x.shape[1], F_OUT)
        # Tight check vs. a reference that mirrors the kernel's precision choices.
        ref_m = reference_forward_matched(x, edge_index, params)
        assert jnp.allclose(out, ref_m, atol=2e-3, rtol=2e-3), \
            "mismatch vs matched-precision reference"
        # Looser check vs. exact f32 module semantics (difference = bf16 operands).
        ref_f = reference_forward_f32(x, edge_index, params)
        assert jnp.allclose(out, ref_f, atol=6e-2, rtol=6e-2), \
            "mismatch vs f32 module reference"

    N, E = 32, 96   # 32 nodes / 96 directed edges per graph

    # Small case: 8 graphs -> 2 node tiles -> T=1, grid=2.
    run_and_check(jax.random.normal(k_x, (8, N, F_IN), jnp.float32),
                  jax.random.randint(k_e, (8, 2, E), 0, N, jnp.int32))

    # Larger batch exercising the super-tile path: 64 graphs -> 16 tiles -> T=2, grid=8.
    run_and_check(jax.random.normal(k_x2, (64, N, F_IN), jnp.float32),
                  jax.random.randint(k_e2, (64, 2, E), 0, N, jnp.int32))

    print("KERNEL_OK")
</pallas_src>

<mosaic_0001>
module attributes {stable_mosaic.version = 11 : i64} {
  func.func @graph_encoder_kernel(%arg0: i32, %arg1: memref<1x128x128xbf16, #tpu.memory_space<vmem>>, %arg2: memref<1x128x64xbf16, #tpu.memory_space<vmem>>, %arg3: memref<208x128xbf16, #tpu.memory_space<vmem>>, %arg4: memref<1x128x128xbf16, #tpu.memory_space<vmem>>) attributes {dimension_semantics = [#tpu.dimension_semantics<parallel>], iteration_bounds = array<i64: 2>, scalar_prefetch = 0 : i64, scratch_operands = 0 : i64, tpu.core_type = #tpu.core_type<tc>, window_params = [{transform_indices = @transform_0, window_bounds = array<i64: 1, 128, 128>}, {transform_indices = @transform_1, window_bounds = array<i64: 1, 128, 64>}, {pipeline_mode = #tpu.pipeline_mode<synchronous>, transform_indices = @transform_2, window_bounds = array<i64: 208, 128>}, {transform_indices = @transform_3, window_bounds = array<i64: 1, 128, 128>}]} {
    %c0 = arith.constant 0 : index
    %c0_0 = arith.constant 0 : index
    %0 = vector.load %arg3[%c0, %c0_0] : memref<208x128xbf16, #tpu.memory_space<vmem>>, vector<64x32xbf16>
    %c64 = arith.constant 64 : index
    %c0_1 = arith.constant 0 : index
    %1 = vector.load %arg3[%c64, %c0_1] : memref<208x128xbf16, #tpu.memory_space<vmem>>, vector<1x32xbf16>
    %c80 = arith.constant 80 : index
    %c0_2 = arith.constant 0 : index
    %2 = vector.load %arg3[%c80, %c0_2] : memref<208x128xbf16, #tpu.memory_space<vmem>>, vector<32x32xbf16>
    %c112 = arith.constant 112 : index
    %c0_3 = arith.constant 0 : index
    %3 = vector.load %arg3[%c112, %c0_3] : memref<208x128xbf16, #tpu.memory_space<vmem>>, vector<1x32xbf16>
    %c128 = arith.constant 128 : index
    %c0_4 = arith.constant 0 : index
    %4 = vector.load %arg3[%c128, %c0_4] : memref<208x128xbf16, #tpu.memory_space<vmem>>, vector<32x16xbf16>
    %c160 = arith.constant 160 : index
    %c0_5 = arith.constant 0 : index
    %5 = vector.load %arg3[%c160, %c0_5] : memref<208x128xbf16, #tpu.memory_space<vmem>>, vector<1x16xbf16>
    %c176 = arith.constant 176 : index
    %c0_6 = arith.constant 0 : index
    %6 = vector.load %arg3[%c176, %c0_6] : memref<208x128xbf16, #tpu.memory_space<vmem>>, vector<16x128xbf16>
    %c192 = arith.constant 192 : index
    %c0_7 = arith.constant 0 : index
    %7 = vector.load %arg3[%c192, %c0_7] : memref<208x128xbf16, #tpu.memory_space<vmem>>, vector<1x128xbf16>
    %c0_i32 = arith.constant 0 : i32
    %8 = arith.index_cast %c0_i32 : i32 to index
    %c0_8 = arith.constant 0 : index
    %c0_9 = arith.constant 0 : index
    %9 = vector.load %arg1[%8, %c0_8, %c0_9] : memref<1x128x128xbf16, #tpu.memory_space<vmem>>, vector<1x128x128xbf16>
    %10 = vector.shape_cast %9 : vector<1x128x128xbf16> to vector<128x128xbf16>
    %11 = arith.index_cast %c0_i32 : i32 to index
    %c0_10 = arith.constant 0 : index
    %c0_11 = arith.constant 0 : index
    %12 = vector.load %arg2[%11, %c0_10, %c0_11] : memref<1x128x64xbf16, #tpu.memory_space<vmem>>, vector<1x128x64xbf16>
    %13 = vector.shape_cast %12 : vector<1x128x64xbf16> to vector<128x64xbf16>
    %cst = arith.constant dense<0.000000e+00> : vector<128x64xf32>
    %14 = tpu.matmul %10, %13, %cst {dimension_numbers = #tpu.dot_dimension_numbers<[1], [0], [0], [1], [0, 0, 1, 1], [], []>} : vector<128x128xbf16>, vector<128x64xbf16>, vector<128x64xf32> -> vector<128x64xf32>
    %15 = arith.truncf %14 : vector<128x64xf32> to vector<128x64xbf16>
    %cst_12 = arith.constant dense<0.000000e+00> : vector<128x32xf32>
    %16 = tpu.matmul %15, %0, %cst_12 {dimension_numbers = #tpu.dot_dimension_numbers<[1], [0], [0], [1], [0, 0, 1, 1], [], []>} : vector<128x64xbf16>, vector<64x32xbf16>, vector<128x32xf32> -> vector<128x32xf32>
    %17 = arith.extf %1 : vector<1x32xbf16> to vector<1x32xf32>
    %18 = vector.broadcast %17 : vector<1x32xf32> to vector<128x32xf32>
    %19 = arith.addf %16, %18 : vector<128x32xf32>
    %cst_13 = arith.constant 0.000000e+00 : f32
    %20 = vector.broadcast %cst_13 : f32 to vector<128x32xf32>
    %21 = arith.maximumf %19, %20 : vector<128x32xf32>
    %22 = arith.truncf %21 : vector<128x32xf32> to vector<128x32xbf16>
    %cst_14 = arith.constant dense<0.000000e+00> : vector<128x32xf32>
    %23 = tpu.matmul %22, %2, %cst_14 {dimension_numbers = #tpu.dot_dimension_numbers<[1], [0], [0], [1], [0, 0, 1, 1], [], []>} : vector<128x32xbf16>, vector<32x32xbf16>, vector<128x32xf32> -> vector<128x32xf32>
    %24 = arith.extf %3 : vector<1x32xbf16> to vector<1x32xf32>
    %25 = vector.broadcast %24 : vector<1x32xf32> to vector<128x32xf32>
    %26 = arith.addf %23, %25 : vector<128x32xf32>
    %cst_15 = arith.constant 0.000000e+00 : f32
    %27 = vector.broadcast %cst_15 : f32 to vector<128x32xf32>
    %28 = arith.maximumf %26, %27 : vector<128x32xf32>
    %29 = arith.truncf %28 : vector<128x32xf32> to vector<128x32xbf16>
    %cst_16 = arith.constant dense<0.000000e+00> : vector<128x32xf32>
    %30 = tpu.matmul %10, %29, %cst_16 {dimension_numbers = #tpu.dot_dimension_numbers<[1], [0], [0], [1], [0, 0, 1, 1], [], []>} : vector<128x128xbf16>, vector<128x32xbf16>, vector<128x32xf32> -> vector<128x32xf32>
    %31 = arith.truncf %30 : vector<128x32xf32> to vector<128x32xbf16>
    %cst_17 = arith.constant dense<0.000000e+00> : vector<128x16xf32>
    %32 = tpu.matmul %31, %4, %cst_17 {dimension_numbers = #tpu.dot_dimension_numbers<[1], [0], [0], [1], [0, 0, 1, 1], [], []>} : vector<128x32xbf16>, vector<32x16xbf16>, vector<128x16xf32> -> vector<128x16xf32>
    %33 = arith.extf %5 : vector<1x16xbf16> to vector<1x16xf32>
    %34 = vector.broadcast %33 : vector<1x16xf32> to vector<128x16xf32>
    %35 = arith.addf %32, %34 : vector<128x16xf32>
    %cst_18 = arith.constant 0.000000e+00 : f32
    %36 = vector.broadcast %cst_18 : f32 to vector<128x16xf32>
    %37 = arith.maximumf %35, %36 : vector<128x16xf32>
    %38 = arith.truncf %37 : vector<128x16xf32> to vector<128x16xbf16>
    %cst_19 = arith.constant dense<0.000000e+00> : vector<128x128xf32>
    %39 = tpu.matmul %38, %6, %cst_19 {dimension_numbers = #tpu.dot_dimension_numbers<[1], [0], [0], [1], [0, 0, 1, 1], [], []>} : vector<128x16xbf16>, vector<16x128xbf16>, vector<128x128xf32> -> vector<128x128xf32>
    %40 = arith.extf %7 : vector<1x128xbf16> to vector<1x128xf32>
    %41 = vector.broadcast %40 : vector<1x128xf32> to vector<128x128xf32>
    %42 = arith.addf %39, %41 : vector<128x128xf32>
    %43 = arith.truncf %42 : vector<128x128xf32> to vector<128x128xbf16>
    %44 = arith.index_cast %c0_i32 : i32 to index
    %c0_20 = arith.constant 0 : index
    %c0_21 = arith.constant 0 : index
    %45 = vector.load %arg4[%44, %c0_20, %c0_21] : memref<1x128x128xbf16, #tpu.memory_space<vmem>>, vector<1x128x128xbf16>
    %46 = vector.shape_cast %45 : vector<1x128x128xbf16> to vector<128x128xbf16>
    %47 = vector.shape_cast %43 : vector<128x128xbf16> to vector<1x128x128xbf16>
    tpu.vector_store %arg4[%44, %c0_20, %c0_21], %47 {strides = array<i32>} : memref<1x128x128xbf16, #tpu.memory_space<vmem>>, vector<1x128x128xbf16>,
    %c1_i32 = arith.constant 1 : i32
    return
  }
  func.func @transform_0(%arg0: i32) -> (i32, i32, i32) {
    %c0_i32 = arith.constant 0 : i32
    %c0_i32_0 = arith.constant 0 : i32
    %c0_i32_1 = arith.constant 0 : i32
    return %arg0, %c0_i32, %c0_i32_0 : i32, i32, i32
  }
  func.func @transform_1(%arg0: i32) -> (i32, i32, i32) {
    %c0_i32 = arith.constant 0 : i32
    %c0_i32_0 = arith.constant 0 : i32
    %c0_i32_1 = arith.constant 0 : i32
    return %arg0, %c0_i32, %c0_i32_0 : i32, i32, i32
  }
  func.func @transform_2(%arg0: i32) -> (i32, i32) {
    %c0_i32 = arith.constant 0 : i32
    %c0_i32_0 = arith.constant 0 : i32
    %c0_i32_1 = arith.constant 0 : i32
    return %c0_i32, %c0_i32_0 : i32, i32
  }
  func.func @transform_3(%arg0: i32) -> (i32, i32, i32) {
    %c0_i32 = arith.constant 0 : i32
    %c0_i32_0 = arith.constant 0 : i32
    %c0_i32_1 = arith.constant 0 : i32
    return %arg0, %c0_i32, %c0_i32_0 : i32, i32, i32
  }
}

</mosaic_0001>

<llo_original>
// kernel: tpu_custom_call.1
$region0: #{tpu_custom_call.1}
  #allocation0 [shape = 'u32[]', space=smem, size = 0x4, offset = 0x4, fixed_abs, tag = 'smem constant byte address 0x4 - core index']
  #allocation1 [shape = 'u32[72,128]{1,0:T(1,128)}', space=vmem, size = 0x9000, scoped, tag = 'internal scratch']
  %s0 = inlined_call_operand.vmem [shape: bf16[2,128,128], index: 0, kind: input, shape index: {}]
  %s1 = inlined_call_operand.vmem [shape: bf16[2,128,64], index: 1, kind: input, shape index: {}]
  %s2 = inlined_call_operand.hbm [shape: bf16[208,128], index: 2, kind: input, shape index: {}]
  %s3 = inlined_call_operand.hbm [shape: bf16[2,128,128], index: 3, kind: output, shape index: {}]
  %s4 = sld [smem:[#allocation0]]
  $region49: #{tpu_custom_call.1} parent=0
    _
  %s6 = ssub.s32 1, %s4
  %s7 = scalar_select 0, %s6, %s4
  $region1: #{tpu_custom_call.1} parent=0
    #allocation2 [shape = 'u8[53248]{0}', space=vmem, size = 0xd000, scoped, tag = 'input window, operand 2, single buffered']
    #allocation3 [shape = 's32[2]{0}', space=sflag, size = 0x8, scoped, tag = 'scoped memory for tpu_custom_call.1']
    #allocation4 [shape = 's32[2]{0}', space=sflag, size = 0x8, scoped, tag = 'scoped memory for tpu_custom_call.1']
    #allocation5 [shape = 'u8[65536]{0}', space=vmem, size = 0x10000, scoped, tag = 'output window, operand 0']
    %8 = vsyncpa [#allocation3], 0
    %9 = vsyncpa [#allocation4], 0
    %s10 = scalar_lea.sflag [#allocation4], 1
    %11 = vsyncpa %s10, 0
    loop: start=0, step=1, limit=4
    $region2: #{tpu_custom_call.1} parent=1 // loop_pre_header
      _
    $region3: #{tpu_custom_call.1} parent=1 // loop_header
      %s13 = sphi 0, %s17
      %p14 = scmp.ge.s32.totalorder %s13, 4
      %s23 = sphi 0, %s25
      %s26 = sphi 0, %s23
      %s27 = sphi 0, %s26
      %s43 = sphi 0, %s27
      %s49 = sphi 0, %s51
      %s52 = sphi 0, %s49
      %s53 = sphi 0, %s52
      %s69 = sphi 0, %s53
      %s73 = sphi 0, %s73
      %s75 = sphi 0, %s73
      %s76 = sphi 0, %s75
      %s90 = sphi 0, %s76
      %s96 = sphi 0, %s98
      %s99 = sphi 0, %s96
      %s100 = sphi 0, %s99
      %s116 = sphi 0, %s100
    $region4: #{tpu_custom_call.1} parent=1 // loop_header_branch
      %16 = sbr.rel (%p14) target = $region8
    $region5: #{tpu_custom_call.1} parent=1 // loop_body
      %s18 = ssub.s32 %s13, 1
      %s19 = ssub.s32 %s13, 2
      %s20 = sadd.s32 %s13, 1
      %s21 = ssub.s32 %s13, %s20
      %p22 = scmp.eq.s32.totalorder %s21, 0
      %s24 = sadd.s32 %s23, 1
      %s25 = scalar_select %p22, %s23, %s24
      %p28 = pneg %p22
      %p29 = scmp.eq.s32.totalorder %s13, 1
      %p30 = por %p28, %p29
      %p31 = scmp.ne.s32.totalorder %s23, %s26
      %p32 = scmp.eq.s32.totalorder %s13, 0
      %p33 = por %p31, %p32
      %p34 = scmp.ne.s32.totalorder %s23, %s26
      %p35 = scmp.eq.s32.totalorder %s18, 1
      %p36 = por %p34, %p35
      %p37 = scmp.ne.s32.totalorder %s26, %s27
      %p38 = scmp.eq.s32.totalorder %s18, 0
      %p39 = por %p37, %p38
      %p40 = scmp.ne.s32.totalorder %s26, %s27
      %p41 = scmp.eq.s32.totalorder %s19, 1
      %p42 = por %p40, %p41
      %p44 = scmp.ne.s32.totalorder %s27, %s43
      %p45 = scmp.eq.s32.totalorder %s19, 0
      %p46 = por %p44, %p45
      %s47 = ssub.s32 %s13, %s20
      %p48 = scmp.eq.s32.totalorder %s47, 0
      %s50 = sadd.s32 %s49, 1
      %s51 = scalar_select %p48, %s49, %s50
      %p54 = pneg %p48
      %p55 = scmp.eq.s32.totalorder %s13, 1
      %p56 = por %p54, %p55
      %p57 = scmp.ne.s32.totalorder %s49, %s52
      %p58 = scmp.eq.s32.totalorder %s13, 0
      %p59 = por %p57, %p58
      %p60 = scmp.ne.s32.totalorder %s49, %s52
      %p61 = scmp.eq.s32.totalorder %s18, 1
      %p62 = por %p60, %p61
      %p63 = scmp.ne.s32.totalorder %s52, %s53
      %p64 = scmp.eq.s32.totalorder %s18, 0
      %p65 = por %p63, %p64
      %p66 = scmp.ne.s32.totalorder %s52, %s53
      %p67 = scmp.eq.s32.totalorder %s19, 1
      %p68 = por %p66, %p67
      %p70 = scmp.ne.s32.totalorder %s53, %s69
      %p71 = scmp.eq.s32.totalorder %s19, 0
      %p72 = por %p70, %p71
      %s74 = sadd.s32 %s73, 1
      %p77 = scmp.eq.s32.totalorder %s13, 1
      %p78 = scmp.ne.s32.totalorder %s73, %s75
      %p79 = scmp.eq.s32.totalorder %s13, 0
      %p80 = por %p78, %p79
      %p81 = scmp.ne.s32.totalorder %s73, %s75
      %p82 = scmp.eq.s32.totalorder %s18, 1
      %p83 = por %p81, %p82
      %p84 = scmp.ne.s32.totalorder %s75, %s76
      %p85 = scmp.eq.s32.totalorder %s18, 0
      %p86 = por %p84, %p85
      %p87 = scmp.ne.s32.totalorder %s75, %s76
      %p88 = scmp.eq.s32.totalorder %s19, 1
      %p89 = por %p87, %p88
      %p91 = scmp.ne.s32.totalorder %s76, %s90
      %p92 = scmp.eq.s32.totalorder %s19, 0
      %p93 = por %p91, %p92
      %s94 = ssub.s32 %s13, %s20
      %p95 = scmp.eq.s32.totalorder %s94, 0
      %s97 = sadd.s32 %s96, 1
      %s98 = scalar_select %p95, %s96, %s97
      %p101 = pneg %p95
      %p102 = scmp.eq.s32.totalorder %s13, 1
      %p103 = por %p101, %p102
      %p104 = scmp.ne.s32.totalorder %s96, %s99
      %p105 = scmp.eq.s32.totalorder %s13, 0
      %p106 = por %p104, %p105
      %p107 = scmp.ne.s32.totalorder %s96, %s99
      %p108 = scmp.eq.s32.totalorder %s18, 1
      %p109 = por %p107, %p108
      %p110 = scmp.ne.s32.totalorder %s99, %s100
      %p111 = scmp.eq.s32.totalorder %s18, 0
      %p112 = por %p110, %p111
      %p113 = scmp.ne.s32.totalorder %s99, %s100
      %p114 = scmp.eq.s32.totalorder %s19, 1
      %p115 = por %p113, %p114
      %p117 = scmp.ne.s32.totalorder %s100, %s116
      %p118 = scmp.eq.s32.totalorder %s19, 0
      %p119 = por %p117, %p118
      %p120 = scmp.le.s32.totalorder 1, %s13
      %p121 = scmp.lt.s32.totalorder %s13, 3
      %p122 = pnand %p120, %p121
      %p123 = pneg %p122
      // Predicated region
      $region9: #{tpu_custom_call.1} parent=5 // pred_check
        _
      $region10: #{tpu_custom_call.1} parent=5 // pred_check_branch
        %125 = sbr.rel (%p122) target = $region12
      $region11: #{tpu_custom_call.1} parent=5 // pred_region
        %s126 = ssub.s32 %s13, 1
        // Predicated region
        $region13: #{tpu_custom_call.1} parent=11 // pred_check
          %p127 = pneg %p86
        $region14: #{tpu_custom_call.1} parent=11 // pred_check_branch
          %129 = sbr.rel (%p127) target = $region16
        $region15: #{tpu_custom_call.1} parent=11 // pred_region
          %131 = vsyncadd [#allocation3], 0
          %s132 = sshll.u32 %s2, 4
          %s133 = int_to_ptr.hbm [resolvable:$true] %s132
          %s134 = sshll.u32 [#allocation2], 4
          %s135 = int_to_ptr.vmem [resolvable:$true] %s134
          %140 = dma.hbm_to_vmem [thread:$0]  %s133, 1664, %s135, [#allocation3], 64, 64, 4
        $region16: #{tpu_custom_call.1} parent=11 // pred_fallthru
          _
      $region12: #{tpu_custom_call.1} parent=5 // pred_fallthru
        _
      %p141 = scmp.lt.s32.totalorder %s13, 2
      // Predicated region
      $region17: #{tpu_custom_call.1} parent=5 // pred_check
        %p142 = pneg %p141
      $region18: #{tpu_custom_call.1} parent=5 // pred_check_branch
        %144 = sbr.rel (%p142) target = $region20
      $region19: #{tpu_custom_call.1} parent=5 // pred_region
        // Predicated region
        $region21: #{tpu_custom_call.1} parent=19 // pred_check
          %p145 = pneg %p33
        $region22: #{tpu_custom_call.1} parent=19 // pred_check_branch
          %147 = sbr.rel (%p145) target = $region24
        $region23: #{tpu_custom_call.1} parent=19 // pred_region
          %p148 = scmp.lt.s32.totalorder %s13, 1
          %s149 = scalar_select %p148, %s13, 1
          %s150 = smul.addr %s149, 16
          %s151 = smul.addr %s150, 4
          %s152 = scalar_lea.vmem %s0, %s151
        $region24: #{tpu_custom_call.1} parent=19 // pred_fallthru
          _
        // Predicated region
        $region25: #{tpu_custom_call.1} parent=19 // pred_check
          %p153 = pneg %p59
        $region26: #{tpu_custom_call.1} parent=19 // pred_check_branch
          %155 = sbr.rel (%p153) target = $region28
        $region27: #{tpu_custom_call.1} parent=19 // pred_region
          %p156 = scmp.lt.s32.totalorder %s13, 1
          %s157 = scalar_select %p156, %s13, 1
          %s158 = smul.addr %s157, 16
          %s159 = smul.addr %s158, 4
          %s160 = scalar_lea.vmem %s1, %s159
        $region28: #{tpu_custom_call.1} parent=19 // pred_fallthru
          _
      $region20: #{tpu_custom_call.1} parent=5 // pred_fallthru
        _
      %p161 = scmp.le.s32.totalorder 1, %s13
      %p162 = scmp.lt.s32.totalorder %s13, 3
      %p163 = pnand %p161, %p162
      %p164 = pneg %p163
      // Predicated region
      $region29: #{tpu_custom_call.1} parent=5 // pred_check
        _
      $region30: #{tpu_custom_call.1} parent=5 // pred_check_branch
        %166 = sbr.rel (%p163) target = $region32
      $region31: #{tpu_custom_call.1} parent=5 // pred_region
        %s167 = ssub.s32 %s13, 1
        // Predicated region
        $region33: #{tpu_custom_call.1} parent=31 // pred_check
          %p168 = pneg %p86
        $region34: #{tpu_custom_call.1} parent=31 // pred_check_branch
          %170 = sbr.rel (%p168) target = $region36
        $region35: #{tpu_custom_call.1} parent=31 // pred_region
          %172 = dma.done [#allocation3], 1664
        $region36: #{tpu_custom_call.1} parent=31 // pred_fallthru
          _
        %p173 = scmp.lt.s32.totalorder %s18, 1
        %s174 = scalar_select %p173, %s18, 1
        %s175 = smul.addr %s174, 16
        %s176 = smul.addr %s175, 4
        %s177 = scalar_lea.vmem %s0, %s176
        %p178 = pneg %p39
        %p179 = pneg %p36
        %p180 = scmp.lt.s32.totalorder %s18, 1
        %s181 = scalar_select %p180, %s18, 1
        %s182 = smul.addr %s181, 16
        %s183 = smul.addr %s182, 4
        %s184 = scalar_lea.vmem %s1, %s183
        %p185 = pneg %p65
        %p186 = pneg %p62
        %p187 = pneg %p86
        %p188 = pneg %p83
        %p189 = pneg %p112
        %p190 = pneg %p109
        %s191 = sand.u32 %s99, 1
        %s192 = scalar_lea.sflag [#allocation4], %s191
        %s193 = sand.u32 %s99, 1
        %s194 = smul.addr %s193, 64
        %s195 = scalar_lea.vmem [#allocation5], %s194
        %p196 = scmp.lt.s32.totalorder %s18, 1
        %s197 = scalar_select %p196, %s18, 1
        %s198 = smul.addr %s197, 16
        %s199 = smul.addr %s198, 4
        %s200 = scalar_lea.vmem %s0, %s199
        %p201 = scmp.lt.s32.totalorder %s18, 1
        %s202 = scalar_select %p201, %s18, 1
        %s203 = smul.addr %s202, 16
        %s204 = smul.addr %s203, 4
        %s205 = scalar_lea.vmem %s1, %s204
        %v207 = vld [vmem:[#allocation2] sm:$0xf]
        %v208 = vld [vmem:[#allocation2 + $0x4] sm:$0xf]
        %v209 = vld [vmem:[#allocation2 + $0x8] sm:$0xf]
        %v210 = vld [vmem:[#allocation2 + $0xc] sm:$0xf]
        %v211 = vld [vmem:[#allocation2 + $0x10] sm:$0xf]
        %v212 = vld [vmem:[#allocation2 + $0x14] sm:$0xf]
        %v213 = vld [vmem:[#allocation2 + $0x18] sm:$0xf]
        %v214 = vld [vmem:[#allocation2 + $0x1c] sm:$0xf]
        %v215 = vld [vmem:[#allocation2 + $0x20] sm:$0x1]
        %v216 = vld [vmem:[#allocation2 + $0x28] sm:$0xf]
        %v217 = vld [vmem:[#allocation2 + $0x2c] sm:$0xf]
        %v218 = vld [vmem:[#allocation2 + $0x30] sm:$0xf]
        %v219 = vld [vmem:[#allocation2 + $0x34] sm:$0xf]
        %v220 = vld [vmem:[#allocation2 + $0x38] sm:$0x1]
        %v221 = vld [vmem:[#allocation2 + $0x40] sm:$0xf]
        %v222 = vld [vmem:[#allocation2 + $0x44] sm:$0xf]
        %v223 = vld [vmem:[#allocation2 + $0x48] sm:$0xf]
        %v224 = vld [vmem:[#allocation2 + $0x4c] sm:$0xf]
        %v225 = vld [vmem:[#allocation2 + $0x50] sm:$0x1]
        %v226 = vld [vmem:[#allocation2 + $0x58] sm:$0xf]
        %v227 = vld [vmem:[#allocation2 + $0x5c] sm:$0xf]
        %v228 = vld [vmem:[#allocation2 + $0x60] sm:$0x1]
        %v229 = vld [vmem:[%s200] sm:$0xf]
        %v230 = vld [vmem:[%s200 + $0x4] sm:$0xf]
        %v231 = vld [vmem:[%s200 + $0x8] sm:$0xf]
        %v232 = vld [vmem:[%s200 + $0xc] sm:$0xf]
        %v233 = vld [vmem:[%s200 + $0x10] sm:$0xf]
        %v234 = vld [vmem:[%s200 + $0x14] sm:$0xf]
        %v235 = vld [vmem:[%s200 + $0x18] sm:$0xf]
        %v236 = vld [vmem:[%s200 + $0x1c] sm:$0xf]
        %v237 = vld [vmem:[%s200 + $0x20] sm:$0xf]
        %v238 = vld [vmem:[%s200 + $0x24] sm:$0xf]
        %v239 = vld [vmem:[%s200 + $0x28] sm:$0xf]
        %v240 = vld [vmem:[%s200 + $0x2c] sm:$0xf]
        %v241 = vld [vmem:[%s200 + $0x30] sm:$0xf]
        %v242 = vld [vmem:[%s200 + $0x34] sm:$0xf]
        %v243 = vld [vmem:[%s200 + $0x38] sm:$0xf]
        %v244 = vld [vmem:[%s200 + $0x3c] sm:$0xf]
        %v245 = vld [vmem:[%s205] sm:$0xf]
        %v246 = vld [vmem:[%s205 + $0x4] sm:$0xf]
        %v247 = vld [vmem:[%s205 + $0x8] sm:$0xf]
        %v248 = vld [vmem:[%s205 + $0xc] sm:$0xf]
        %v249 = vld [vmem:[%s205 + $0x10] sm:$0xf]
        %v250 = vld [vmem:[%s205 + $0x14] sm:$0xf]
        %v251 = vld [vmem:[%s205 + $0x18] sm:$0xf]
        %v252 = vld [vmem:[%s205 + $0x1c] sm:$0xf]
        %v253 = vld [vmem:[%s205 + $0x20] sm:$0xf]
        %v254 = vld [vmem:[%s205 + $0x24] sm:$0xf]
        %v255 = vld [vmem:[%s205 + $0x28] sm:$0xf]
        %v256 = vld [vmem:[%s205 + $0x2c] sm:$0xf]
        %v257 = vld [vmem:[%s205 + $0x30] sm:$0xf]
        %v258 = vld [vmem:[%s205 + $0x34] sm:$0xf]
        %v259 = vld [vmem:[%s205 + $0x38] sm:$0xf]
        %v260 = vld [vmem:[%s205 + $0x3c] sm:$0xf]
        %v277 = vunpack.c.l.b16 %v229
        %v278 = vunpack.c.l.b16 %v230
        %v279 = vunpack.c.l.b16 %v231
        %v280 = vunpack.c.l.b16 %v232
        %v281 = vunpack.c.l.b16 %v233
        %v282 = vunpack.c.l.b16 %v234
        %v283 = vunpack.c.l.b16 %v235
        %v284 = vunpack.c.l.b16 %v236
        %v285 = vunpack.c.l.b16 %v237
        %v286 = vunpack.c.l.b16 %v238
        %v287 = vunpack.c.l.b16 %v239
        %v288 = vunpack.c.l.b16 %v240
        %v289 = vunpack.c.l.b16 %v241
        %v290 = vunpack.c.l.b16 %v242
        %v291 = vunpack.c.l.b16 %v243
        %v292 = vunpack.c.l.b16 %v244
        %v293 = vpack.c.b16 %v278, %v277
        %v294 = vpack.c.b16 %v280, %v279
        %v295 = vpack.c.b16 %v282, %v281
        %v296 = vpack.c.b16 %v284, %v283
        %v297 = vpack.c.b16 %v286, %v285
        %v298 = vpack.c.b16 %v288, %v287
        %v299 = vpack.c.b16 %v290, %v289
        %v300 = vpack.c.b16 %v292, %v291
        %v325 = vunpack.c.l.b16 %v245
        %v326 = vunpack.c.l.b16 %v246
        %v327 = vunpack.c.l.b16 %v247
        %v328 = vunpack.c.l.b16 %v248
        %v329 = vunpack.c.l.b16 %v249
        %v330 = vunpack.c.l.b16 %v250
        %v331 = vunpack.c.l.b16 %v251
        %v332 = vunpack.c.l.b16 %v252
        %v333 = vunpack.c.l.b16 %v253
        %v334 = vunpack.c.l.b16 %v254
        %v335 = vunpack.c.l.b16 %v255
        %v336 = vunpack.c.l.b16 %v256
        %v337 = vunpack.c.l.b16 %v257
        %v338 = vunpack.c.l.b16 %v258
        %v339 = vunpack.c.l.b16 %v259
        %v340 = vunpack.c.l.b16 %v260
        %v341 = vpack.c.b16 %v326, %v325
        %v342 = vpack.c.b16 %v328, %v327
        %v343 = vpack.c.b16 %v330, %v329
        %v344 = vpack.c.b16 %v332, %v331
        %v345 = vpack.c.b16 %v334, %v333
        %v346 = vpack.c.b16 %v336, %v335
        %v347 = vpack.c.b16 %v338, %v337
        %v348 = vpack.c.b16 %v340, %v339
        %357 = vmatpush.bf16.msra.mxu0 %v348
        %358 = vmatpush.bf16.msra.mxu0 %v347
        %359 = vmatpush.bf16.msra.mxu0 %v346
        %360 = vmatpush.bf16.msra.mxu0 %v345
        %361 = vmatpush.bf16.msra.mxu0 %v344
        %362 = vmatpush.bf16.msra.mxu0 %v343
        %363 = vmatpush.bf16.msra.mxu0 %v342
        %364 = vmatpush.bf16.msra.mxu0 %v341
        %365 = vmatmul.bf16.gmra.mxu0 %v293
        %v366 = vpop.f32.mrf.mxu0
        %v367 = vadd.f32 0.0, %v366
        %v368 = vpop.f32.mrf.mxu0
        %v369 = vadd.f32 0.0, %v368
        %370 = vmatmul.bf16.gmra.mxu0 %v294
        %v371 = vpop.f32.mrf.mxu0
        %v372 = vadd.f32 0.0, %v371
        %v373 = vpop.f32.mrf.mxu0
        %v374 = vadd.f32 0.0, %v373
        %375 = vmatmul.bf16.gmra.mxu0 %v295
        %v376 = vpop.f32.mrf.mxu0
        %v377 = vadd.f32 0.0, %v376
        %v378 = vpop.f32.mrf.mxu0
        %v379 = vadd.f32 0.0, %v378
        %380 = vmatmul.bf16.gmra.mxu0 %v296
        %v381 = vpop.f32.mrf.mxu0
        %v382 = vadd.f32 0.0, %v381
        %v383 = vpop.f32.mrf.mxu0
        %v384 = vadd.f32 0.0, %v383
        %385 = vmatmul.bf16.gmra.mxu0 %v297
        %v386 = vpop.f32.mrf.mxu0
        %v387 = vadd.f32 0.0, %v386
        %v388 = vpop.f32.mrf.mxu0
        %v389 = vadd.f32 0.0, %v388
        %390 = vmatmul.bf16.gmra.mxu0 %v298
        %v391 = vpop.f32.mrf.mxu0
        %v392 = vadd.f32 0.0, %v391
        %v393 = vpop.f32.mrf.mxu0
        %v394 = vadd.f32 0.0, %v393
        %395 = vmatmul.bf16.gmra.mxu0 %v299
        %v396 = vpop.f32.mrf.mxu0
        %v397 = vadd.f32 0.0, %v396
        %v398 = vpop.f32.mrf.mxu0
        %v399 = vadd.f32 0.0, %v398
        %400 = vmatmul.bf16.gmra.mxu0 %v300
        %v401 = vpop.f32.mrf.mxu0
        %v402 = vadd.f32 0.0, %v401
        %v403 = vpop.f32.mrf.mxu0
        %v404 = vadd.f32 0.0, %v403
        %405 = vdwg.mxu0
        %v406 = vpack.c.bf16 %v369, %v367
        %v407 = vpack.c.bf16 %v374, %v372
        %v408 = vpack.c.bf16 %v379, %v377
        %v409 = vpack.c.bf16 %v384, %v382
        %v410 = vpack.c.bf16 %v389, %v387
        %v411 = vpack.c.bf16 %v394, %v392
        %v412 = vpack.c.bf16 %v399, %v397
        %v413 = vpack.c.bf16 %v404, %v402
        %v414 = vunpack.c.l.bf16 %v215
        %v415 = vperm.slane %v414, 0
        %v424 = vunpack.c.l.b16 %v207
        %v425 = vunpack.c.l.b16 %v208
        %v426 = vunpack.c.l.b16 %v209
        %v427 = vunpack.c.l.b16 %v210
        %v428 = vunpack.c.l.b16 %v211
        %v429 = vunpack.c.l.b16 %v212
        %v430 = vunpack.c.l.b16 %v213
        %v431 = vunpack.c.l.b16 %v214
        %v432 = vpack.c.b16 %v425, %v424
        %v433 = vpack.c.b16 %v427, %v426
        %v434 = vpack.c.b16 %v429, %v428
        %v435 = vpack.c.b16 %v431, %v430
        %vm440 = vcmask 523264
        %v442 = vsel %vm440, %v406, 0
        %v445 = vsel %vm440, %v407, 0
        %v448 = vsel %vm440, %v408, 0
        %v451 = vsel %vm440, %v409, 0
        %v454 = vsel %vm440, %v410, 0
        %v457 = vsel %vm440, %v411, 0
        %v460 = vsel %vm440, %v412, 0
        %v463 = vsel %vm440, %v413, 0
        %465 = vmatpush.bf16.msra.mxu0 0
        %466 = vmatpush.bf16.msra.mxu0 0
        %467 = vmatpush.bf16.msra.mxu0 0
        %468 = vmatpush.bf16.msra.mxu0 0
        %469 = vmatpush.bf16.msra.mxu0 %v435
        %470 = vmatpush.bf16.msra.mxu0 %v434
        %471 = vmatpush.bf16.msra.mxu0 %v433
        %472 = vmatpush.bf16.msra.mxu0 %v432
        %473 = vmatmul.bf16.gmra.mxu0 %v442
        %v474 = vpop.f32.mrf.mxu0
        %v475 = vadd.f32 %v415, %v474
        %v476 = vpop.f32.mrf.mxu0
        %v477 = vadd.f32 %v415, %v476
        %478 = vmatmul.bf16.gmra.mxu0 %v445
        %v479 = vpop.f32.mrf.mxu0
        %v480 = vadd.f32 %v415, %v479
        %v481 = vpop.f32.mrf.mxu0
        %v482 = vadd.f32 %v415, %v481
        %483 = vmatmul.bf16.gmra.mxu0 %v448
        %v484 = vpop.f32.mrf.mxu0
        %v485 = vadd.f32 %v415, %v484
        %v486 = vpop.f32.mrf.mxu0
        %v487 = vadd.f32 %v415, %v486
        %488 = vmatmul.bf16.gmra.mxu0 %v451
        %v489 = vpop.f32.mrf.mxu0
        %v490 = vadd.f32 %v415, %v489
        %v491 = vpop.f32.mrf.mxu0
        %v492 = vadd.f32 %v415, %v491
        %493 = vmatmul.bf16.gmra.mxu0 %v454
        %v494 = vpop.f32.mrf.mxu0
        %v495 = vadd.f32 %v415, %v494
        %v496 = vpop.f32.mrf.mxu0
        %v497 = vadd.f32 %v415, %v496
        %498 = vmatmul.bf16.gmra.mxu0 %v457
        %v499 = vpop.f32.mrf.mxu0
        %v500 = vadd.f32 %v415, %v499
        %v501 = vpop.f32.mrf.mxu0
        %v502 = vadd.f32 %v415, %v501
        %503 = vmatmul.bf16.gmra.mxu0 %v460
        %v504 = vpop.f32.mrf.mxu0
        %v505 = vadd.f32 %v415, %v504
        %v506 = vpop.f32.mrf.mxu0
        %v507 = vadd.f32 %v415, %v506
        %508 = vmatmul.bf16.gmra.mxu0 %v463
        %v509 = vpop.f32.mrf.mxu0
        %v510 = vadd.f32 %v415, %v509
        %v511 = vpop.f32.mrf.mxu0
        %v512 = vadd.f32 %v415, %v511
        %513 = vdwg.mxu0
        %v514 = vmax.f32 %v475, 0.0
        %v515 = vmax.f32 %v477, 0.0
        %v516 = vmax.f32 %v480, 0.0
        %v517 = vmax.f32 %v482, 0.0
        %v518 = vmax.f32 %v485, 0.0
        %v519 = vmax.f32 %v487, 0.0
        %v520 = vmax.f32 %v490, 0.0
        %v521 = vmax.f32 %v492, 0.0
        %v522 = vmax.f32 %v495, 0.0
        %v523 = vmax.f32 %v497, 0.0
        %v524 = vmax.f32 %v500, 0.0
        %v525 = vmax.f32 %v502, 0.0
        %v526 = vmax.f32 %v505, 0.0
        %v527 = vmax.f32 %v507, 0.0
        %v528 = vmax.f32 %v510, 0.0
        %v529 = vmax.f32 %v512, 0.0
        %v530 = vpack.c.bf16 %v515, %v514
        %v531 = vpack.c.bf16 %v517, %v516
        %v532 = vpack.c.bf16 %v519, %v518
        %v533 = vpack.c.bf16 %v521, %v520
        %v534 = vpack.c.bf16 %v523, %v522
        %v535 = vpack.c.bf16 %v525, %v524
        %v536 = vpack.c.bf16 %v527, %v526
        %v537 = vpack.c.bf16 %v529, %v528
        %v538 = vunpack.c.l.bf16 %v220
        %v539 = vperm.slane %v538, 0
        %v544 = vunpack.c.l.b16 %v216
        %v545 = vunpack.c.l.b16 %v217
        %v546 = vunpack.c.l.b16 %v218
        %v547 = vunpack.c.l.b16 %v219
        %v548 = vpack.c.b16 %v545, %v544
        %v549 = vpack.c.b16 %v547, %v546
        %vm552 = vcmask 261120
        %v554 = vsel %vm552, %v530, 0
        %v557 = vsel %vm552, %v531, 0
        %v560 = vsel %vm552, %v532, 0
        %v563 = vsel %vm552, %v533, 0
        %v566 = vsel %vm552, %v534, 0
        %v569 = vsel %vm552, %v535, 0
        %v572 = vsel %vm552, %v536, 0
        %v575 = vsel %vm552, %v537, 0
        %577 = vmatpush.bf16.msra.mxu0 0
        %578 = vmatpush.bf16.msra.mxu0 0
        %579 = vmatpush.bf16.msra.mxu0 0
        %580 = vmatpush.bf16.msra.mxu0 0
        %581 = vmatpush.bf16.msra.mxu0 0
        %582 = vmatpush.bf16.msra.mxu0 0
        %583 = vmatpush.bf16.msra.mxu0 %v549
        %584 = vmatpush.bf16.msra.mxu0 %v548
        %585 = vmatmul.bf16.gmra.mxu0 %v554
        %v586 = vpop.f32.mrf.mxu0
        %v587 = vadd.f32 %v539, %v586
        %v588 = vpop.f32.mrf.mxu0
        %v589 = vadd.f32 %v539, %v588
        %590 = vmatmul.bf16.gmra.mxu0 %v557
        %v591 = vpop.f32.mrf.mxu0
        %v592 = vadd.f32 %v539, %v591
        %v593 = vpop.f32.mrf.mxu0
        %v594 = vadd.f32 %v539, %v593
        %595 = vmatmul.bf16.gmra.mxu0 %v560
        %v596 = vpop.f32.mrf.mxu0
        %v597 = vadd.f32 %v539, %v596
        %v598 = vpop.f32.mrf.mxu0
        %v599 = vadd.f32 %v539, %v598
        %600 = vmatmul.bf16.gmra.mxu0 %v563
        %v601 = vpop.f32.mrf.mxu0
        %v602 = vadd.f32 %v539, %v601
        %v603 = vpop.f32.mrf.mxu0
        %v604 = vadd.f32 %v539, %v603
        %605 = vmatmul.bf16.gmra.mxu0 %v566
        %v606 = vpop.f32.mrf.mxu0
        %v607 = vadd.f32 %v539, %v606
        %v608 = vpop.f32.mrf.mxu0
        %v609 = vadd.f32 %v539, %v608
        %610 = vmatmul.bf16.gmra.mxu0 %v569
        %v611 = vpop.f32.mrf.mxu0
        %v612 = vadd.f32 %v539, %v611
        %v613 = vpop.f32.mrf.mxu0
        %v614 = vadd.f32 %v539, %v613
        %615 = vmatmul.bf16.gmra.mxu0 %v572
        %v616 = vpop.f32.mrf.mxu0
        %v617 = vadd.f32 %v539, %v616
        %v618 = vpop.f32.mrf.mxu0
        %v619 = vadd.f32 %v539, %v618
        %620 = vmatmul.bf16.gmra.mxu0 %v575
        %v621 = vpop.f32.mrf.mxu0
        %v622 = vadd.f32 %v539, %v621
        %v623 = vpop.f32.mrf.mxu0
        %v624 = vadd.f32 %v539, %v623
        %625 = vdwg.mxu0
        %v626 = vmax.f32 %v587, 0.0
        %v627 = vmax.f32 %v589, 0.0
        %v628 = vmax.f32 %v592, 0.0
        %v629 = vmax.f32 %v594, 0.0
        %v630 = vmax.f32 %v597, 0.0
        %v631 = vmax.f32 %v599, 0.0
        %v632 = vmax.f32 %v602, 0.0
        %v633 = vmax.f32 %v604, 0.0
        %v634 = vmax.f32 %v607, 0.0
        %v635 = vmax.f32 %v609, 0.0
        %v636 = vmax.f32 %v612, 0.0
        %v637 = vmax.f32 %v614, 0.0
        %v638 = vmax.f32 %v617, 0.0
        %v639 = vmax.f32 %v619, 0.0
        %v640 = vmax.f32 %v622, 0.0
        %v641 = vmax.f32 %v624, 0.0
        %v642 = vpack.c.bf16 %v627, %v626
        %v643 = vpack.c.bf16 %v629, %v628
        %v644 = vpack.c.bf16 %v631, %v630
        %v645 = vpack.c.bf16 %v633, %v632
        %v646 = vpack.c.bf16 %v635, %v634
        %v647 = vpack.c.bf16 %v637, %v636
        %v648 = vpack.c.bf16 %v639, %v638
        %v649 = vpack.c.bf16 %v641, %v640
        %650 = vmatpush.bf16.msra.mxu0 %v649
        %651 = vmatpush.bf16.msra.mxu0 %v648
        %652 = vmatpush.bf16.msra.mxu0 %v647
        %653 = vmatpush.bf16.msra.mxu0 %v646
        %654 = vmatpush.bf16.msra.mxu0 %v645
        %655 = vmatpush.bf16.msra.mxu0 %v644
        %656 = vmatpush.bf16.msra.mxu0 %v643
        %657 = vmatpush.bf16.msra.mxu0 %v642
        %658 = vmatmul.bf16.gmra.mxu0 %v293
        %v659 = vpop.f32.mrf.mxu0
        %v660 = vadd.f32 0.0, %v659
        %v661 = vpop.f32.mrf.mxu0
        %v662 = vadd.f32 0.0, %v661
        %663 = vmatmul.bf16.gmra.mxu0 %v294
        %v664 = vpop.f32.mrf.mxu0
        %v665 = vadd.f32 0.0, %v664
        %v666 = vpop.f32.mrf.mxu0
        %v667 = vadd.f32 0.0, %v666
        %668 = vmatmul.bf16.gmra.mxu0 %v295
        %v669 = vpop.f32.mrf.mxu0
        %v670 = vadd.f32 0.0, %v669
        %v671 = vpop.f32.mrf.mxu0
        %v672 = vadd.f32 0.0, %v671
        %673 = vmatmul.bf16.gmra.mxu0 %v296
        %v674 = vpop.f32.mrf.mxu0
        %v675 = vadd.f32 0.0, %v674
        %v676 = vpop.f32.mrf.mxu0
        %v677 = vadd.f32 0.0, %v676
        %678 = vmatmul.bf16.gmra.mxu0 %v297
        %v679 = vpop.f32.mrf.mxu0
        %v680 = vadd.f32 0.0, %v679
        %v681 = vpop.f32.mrf.mxu0
        %v682 = vadd.f32 0.0, %v681
        %683 = vmatmul.bf16.gmra.mxu0 %v298
        %v684 = vpop.f32.mrf.mxu0
        %v685 = vadd.f32 0.0, %v684
        %v686 = vpop.f32.mrf.mxu0
        %v687 = vadd.f32 0.0, %v686
        %688 = vmatmul.bf16.gmra.mxu0 %v299
        %v689 = vpop.f32.mrf.mxu0
        %v690 = vadd.f32 0.0, %v689
        %v691 = vpop.f32.mrf.mxu0
        %v692 = vadd.f32 0.0, %v691
        %693 = vmatmul.bf16.gmra.mxu0 %v300
        %v694 = vpop.f32.mrf.mxu0
        %v695 = vadd.f32 0.0, %v694
        %v696 = vpop.f32.mrf.mxu0
        %v697 = vadd.f32 0.0, %v696
        %698 = vdwg.mxu0
        %v699 = vpack.c.bf16 %v662, %v660
        %v700 = vpack.c.bf16 %v667, %v665
        %v701 = vpack.c.bf16 %v672, %v670
        %v702 = vpack.c.bf16 %v677, %v675
        %v703 = vpack.c.bf16 %v682, %v680
        %v704 = vpack.c.bf16 %v687, %v685
        %v705 = vpack.c.bf16 %v692, %v690
        %v706 = vpack.c.bf16 %v697, %v695
        %v707 = vunpack.c.l.bf16 %v225
        %v708 = vperm.slane %v707, 0
        %v713 = vunpack.c.l.b16 %v221
        %v714 = vunpack.c.l.b16 %v222
        %v715 = vunpack.c.l.b16 %v223
        %v716 = vunpack.c.l.b16 %v224
        %v717 = vpack.c.b16 %v714, %v713
        %v718 = vpack.c.b16 %v716, %v715
        %v722 = vsel %vm552, %v699, 0
        %v725 = vsel %vm552, %v700, 0
        %v728 = vsel %vm552, %v701, 0
        %v731 = vsel %vm552, %v702, 0
        %v734 = vsel %vm552, %v703, 0
        %v737 = vsel %vm552, %v704, 0
        %v740 = vsel %vm552, %v705, 0
        %v743 = vsel %vm552, %v706, 0
        %745 = vmatpush.bf16.msra.mxu0 0
        %746 = vmatpush.bf16.msra.mxu0 0
        %747 = vmatpush.bf16.msra.mxu0 0
        %748 = vmatpush.bf16.msra.mxu0 0
        %749 = vmatpush.bf16.msra.mxu0 0
        %750 = vmatpush.bf16.msra.mxu0 0
        %751 = vmatpush.bf16.msra.mxu0 %v718
        %752 = vmatpush.bf16.msra.mxu0 %v717
        %753 = vmatmul.bf16.gmra.mxu0 %v722
        %v754 = vpop.f32.mrf.mxu0
        %v755 = vadd.f32 %v708, %v754
        %v756 = vpop.f32.mrf.mxu0
        %v757 = vadd.f32 %v708, %v756
        %758 = vmatmul.bf16.gmra.mxu0 %v725
        %v759 = vpop.f32.mrf.mxu0
        %v760 = vadd.f32 %v708, %v759
        %v761 = vpop.f32.mrf.mxu0
        %v762 = vadd.f32 %v708, %v761
        %763 = vmatmul.bf16.gmra.mxu0 %v728
        %v764 = vpop.f32.mrf.mxu0
        %v765 = vadd.f32 %v708, %v764
        %v766 = vpop.f32.mrf.mxu0
        %v767 = vadd.f32 %v708, %v766
        %768 = vmatmul.bf16.gmra.mxu0 %v731
        %v769 = vpop.f32.mrf.mxu0
        %v770 = vadd.f32 %v708, %v769
        %v771 = vpop.f32.mrf.mxu0
        %v772 = vadd.f32 %v708, %v771
        %773 = vmatmul.bf16.gmra.mxu0 %v734
        %v774 = vpop.f32.mrf.mxu0
        %v775 = vadd.f32 %v708, %v774
        %v776 = vpop.f32.mrf.mxu0
        %v777 = vadd.f32 %v708, %v776
        %778 = vmatmul.bf16.gmra.mxu0 %v737
        %v779 = vpop.f32.mrf.mxu0
        %v780 = vadd.f32 %v708, %v779
        %v781 = vpop.f32.mrf.mxu0
        %v782 = vadd.f32 %v708, %v781
        %783 = vmatmul.bf16.gmra.mxu0 %v740
        %v784 = vpop.f32.mrf.mxu0
        %v785 = vadd.f32 %v708, %v784
        %v786 = vpop.f32.mrf.mxu0
        %v787 = vadd.f32 %v708, %v786
        %788 = vmatmul.bf16.gmra.mxu0 %v743
        %v789 = vpop.f32.mrf.mxu0
        %v790 = vadd.f32 %v708, %v789
        %v791 = vpop.f32.mrf.mxu0
        %v792 = vadd.f32 %v708, %v791
        %793 = vdwg.mxu0
        %v794 = vmax.f32 %v755, 0.0
        %v795 = vmax.f32 %v757, 0.0
        %v796 = vmax.f32 %v760, 0.0
        %v797 = vmax.f32 %v762, 0.0
        %v798 = vmax.f32 %v765, 0.0
        %v799 = vmax.f32 %v767, 0.0
        %v800 = vmax.f32 %v770, 0.0
        %v801 = vmax.f32 %v772, 0.0
        %v802 = vmax.f32 %v775, 0.0
        %v803 = vmax.f32 %v777, 0.0
        %v804 = vmax.f32 %v780, 0.0
        %v805 = vmax.f32 %v782, 0.0
        %v806 = vmax.f32 %v785, 0.0
        %v807 = vmax.f32 %v787, 0.0
        %v808 = vmax.f32 %v790, 0.0
        %v809 = vmax.f32 %v792, 0.0
        %v810 = vpack.c.bf16 %v795, %v794
        %v811 = vpack.c.bf16 %v797, %v796
        %v812 = vpack.c.bf16 %v799, %v798
        %v813 = vpack.c.bf16 %v801, %v800
        %v814 = vpack.c.bf16 %v803, %v802
        %v815 = vpack.c.bf16 %v805, %v804
        %v816 = vpack.c.bf16 %v807, %v806
        %v817 = vpack.c.bf16 %v809, %v808
        %v818 = vunpack.c.l.bf16 %v228
        %v819 = vperm.slane %v818, 0
        %v822 = vunpack.c.l.b16 %v226
        %v823 = vunpack.c.l.b16 %v227
        %v824 = vpack.c.b16 %v823, %v822
        %vm826 = vcmask 130048
        %v828 = vsel %vm826, %v810, 0
        %v831 = vsel %vm826, %v811, 0
        %v834 = vsel %vm826, %v812, 0
        %v837 = vsel %vm826, %v813, 0
        %v840 = vsel %vm826, %v814, 0
        %v843 = vsel %vm826, %v815, 0
        %v846 = vsel %vm826, %v816, 0
        %v849 = vsel %vm826, %v817, 0
        %851 = vmatpush.bf16.msra.mxu0 0
        %852 = vmatpush.bf16.msra.mxu0 0
        %853 = vmatpush.bf16.msra.mxu0 0
        %854 = vmatpush.bf16.msra.mxu0 0
        %855 = vmatpush.bf16.msra.mxu0 0
        %856 = vmatpush.bf16.msra.mxu0 0
        %857 = vmatpush.bf16.msra.mxu0 0
        %858 = vmatpush.bf16.msra.mxu0 %v824
        %859 = vmatmul.bf16.gmra.mxu0 %v828
        %v860 = vpop.f32.mrf.mxu0
        %v861 = vadd.f32 %v819, %v860
        %v862 = vpop.f32.mrf.mxu0
        %v863 = vadd.f32 %v819, %v862
        %864 = vmatmul.bf16.gmra.mxu0 %v831
        %v865 = vpop.f32.mrf.mxu0
        %v866 = vadd.f32 %v819, %v865
        %v867 = vpop.f32.mrf.mxu0
        %v868 = vadd.f32 %v819, %v867
        %869 = vmatmul.bf16.gmra.mxu0 %v834
        %v870 = vpop.f32.mrf.mxu0
        %v871 = vadd.f32 %v819, %v870
        %v872 = vpop.f32.mrf.mxu0
        %v873 = vadd.f32 %v819, %v872
        %874 = vmatmul.bf16.gmra.mxu0 %v837
        %v875 = vpop.f32.mrf.mxu0
        %v876 = vadd.f32 %v819, %v875
        %v877 = vpop.f32.mrf.mxu0
        %v878 = vadd.f32 %v819, %v877
        %879 = vmatmul.bf16.gmra.mxu0 %v840
        %v880 = vpop.f32.mrf.mxu0
        %v881 = vadd.f32 %v819, %v880
        %v882 = vpop.f32.mrf.mxu0
        %v883 = vadd.f32 %v819, %v882
        %884 = vmatmul.bf16.gmra.mxu0 %v843
        %v885 = vpop.f32.mrf.mxu0
        %v886 = vadd.f32 %v819, %v885
        %v887 = vpop.f32.mrf.mxu0
        %v888 = vadd.f32 %v819, %v887
        %889 = vmatmul.bf16.gmra.mxu0 %v846
        %v890 = vpop.f32.mrf.mxu0
        %v891 = vadd.f32 %v819, %v890
        %v892 = vpop.f32.mrf.mxu0
        %v893 = vadd.f32 %v819, %v892
        %894 = vmatmul.bf16.gmra.mxu0 %v849
        %v895 = vpop.f32.mrf.mxu0
        %v896 = vadd.f32 %v819, %v895
        %v897 = vpop.f32.mrf.mxu0
        %v898 = vadd.f32 %v819, %v897
        %899 = vdwg.mxu0
        %v900 = vpack.c.bf16 %v861, %v861
        %v901 = vpack.c.bf16 %v863, %v863
        %v902 = vpack.c.bf16 %v866, %v866
        %v903 = vpack.c.bf16 %v868, %v868
        %v904 = vpack.c.bf16 %v871, %v871
        %v905 = vpack.c.bf16 %v873, %v873
        %v906 = vpack.c.bf16 %v876, %v876
        %v907 = vpack.c.bf16 %v878, %v878
        %v908 = vpack.c.bf16 %v881, %v881
        %v909 = vpack.c.bf16 %v883, %v883
        %v910 = vpack.c.bf16 %v886, %v886
        %v911 = vpack.c.bf16 %v888, %v888
        %v912 = vpack.c.bf16 %v891, %v891
        %v913 = vpack.c.bf16 %v893, %v893
        %v914 = vpack.c.bf16 %v896, %v896
        %v915 = vpack.c.bf16 %v898, %v898
        %916 = vst [vmem:[%s195] sm:$0xf] %v900
        %917 = vst [vmem:[%s195 + $0x4] sm:$0xf] %v901
        %918 = vst [vmem:[%s195 + $0x8] sm:$0xf] %v902
        %919 = vst [vmem:[%s195 + $0xc] sm:$0xf] %v903
        %920 = vst [vmem:[%s195 + $0x10] sm:$0xf] %v904
        %921 = vst [vmem:[%s195 + $0x14] sm:$0xf] %v905
        %922 = vst [vmem:[%s195 + $0x18] sm:$0xf] %v906
        %923 = vst [vmem:[%s195 + $0x1c] sm:$0xf] %v907
        %924 = vst [vmem:[%s195 + $0x20] sm:$0xf] %v908
        %925 = vst [vmem:[%s195 + $0x24] sm:$0xf] %v909
        %926 = vst [vmem:[%s195 + $0x28] sm:$0xf] %v910
        %927 = vst [vmem:[%s195 + $0x2c] sm:$0xf] %v911
        %928 = vst [vmem:[%s195 + $0x30] sm:$0xf] %v912
        %929 = vst [vmem:[%s195 + $0x34] sm:$0xf] %v913
        %930 = vst [vmem:[%s195 + $0x38] sm:$0xf] %v914
        %931 = vst [vmem:[%s195 + $0x3c] sm:$0xf] %v915
        %s932 = sand.u32 %s99, 1
        %s933 = scalar_lea.sflag [#allocation4], %s932
        %s934 = sand.u32 %s99, 1
        %s935 = smul.addr %s934, 64
        %s936 = scalar_lea.vmem [#allocation5], %s935
        // Predicated region
        $region37: #{tpu_custom_call.1} parent=31 // pred_check
          %p937 = pneg %p109
        $region38: #{tpu_custom_call.1} parent=31 // pred_check_branch
          %939 = sbr.rel (%p937) target = $region40
        $region39: #{tpu_custom_call.1} parent=31 // pred_region
          %941 = vsyncadd %s933, 0
          %s942 = smul.addr %s18, 16
          %s943 = smul.addr %s942, 4
          %s944 = scalar_lea.hbm %s3, %s943
          %s945 = sshll.u32 %s936, 4
          %s946 = int_to_ptr.vmem [resolvable:$true] %s945
          %s947 = sshll.u32 %s944, 4
          %s948 = int_to_ptr.hbm [resolvable:$true] %s947
          %953 = dma.vmem_to_hbm [thread:$0]  %s946, 1024, %s948, %s933, 64, 64, 4
        $region40: #{tpu_custom_call.1} parent=31 // pred_fallthru
          _
      $region32: #{tpu_custom_call.1} parent=5 // pred_fallthru
        _
      %p954 = scmp.le.s32.totalorder 2, %s13
      // Predicated region
      $region41: #{tpu_custom_call.1} parent=5 // pred_check
        %p955 = pneg %p954
      $region42: #{tpu_custom_call.1} parent=5 // pred_check_branch
        %957 = sbr.rel (%p955) target = $region44
      $region43: #{tpu_custom_call.1} parent=5 // pred_region
        %s958 = ssub.s32 %s13, 2
        // Predicated region
        $region45: #{tpu_custom_call.1} parent=43 // pred_check
          %p959 = pneg %p115
        $region46: #{tpu_custom_call.1} parent=43 // pred_check_branch
          %961 = sbr.rel (%p959) target = $region48
        $region47: #{tpu_custom_call.1} parent=43 // pred_region
          %s962 = sand.u32 %s100, 1
          %s963 = scalar_lea.sflag [#allocation4], %s962
          %s964 = sand.u32 %s100, 1
          %s965 = smul.addr %s964, 64
          %s966 = scalar_lea.vmem [#allocation5], %s965
          %968 = dma.done %s963, 1024
        $region48: #{tpu_custom_call.1} parent=43 // pred_fallthru
          _
      $region44: #{tpu_custom_call.1} parent=5 // pred_fallthru
        _
    $region6: #{tpu_custom_call.1} parent=1 // loop_footer
      %s17 = sadd.s32 1, %s13
    $region7: #{tpu_custom_call.1} parent=1 // loop_footer_branch
      %12 = sbr.rel target = $region3
    $region8: #{tpu_custom_call.1} parent=1 // loop_exit
      _
    %969 = vsyncpa [#allocation3], 1
    %s970 = scalar_lea.sflag [#allocation3], 1
    %971 = vsyncpa %s970, 1
    %972 = vsyncpa [#allocation4], 1
    %s973 = scalar_lea.sflag [#allocation4], 1
    %974 = vsyncpa %s973, 1

</llo_original>
